<compile_context>
chip_gen: v5e
topology: v5e:2x2
jax: 0.10.0
libtpu: 0.0.40
codegen_flags: <defaults>
</compile_context>

<pallas_src>
import functools

import jax
import jax.numpy as jnp
from jax.experimental import pallas as pl
from jax.experimental.pallas import tpu as pltpu

_LANE = 128
_SUBLANE = 8


def _cdiv(a, b):
    return -(-a // b)


def _round_up(x, m):
    return _cdiv(x, m) * m


def _generator_kernel(code_ref, w_ref, b_ref, o_ref):
    """One output-column tile of: tanh(codes @ W + b).

    Codes are f32; the streamed weight tile (bf16 or f32) is upcast in VMEM so
    the MXU dot accumulates in f32.  Bias add (VPU) and tanh (EUP) in f32.
    """
    w = w_ref[...].astype(jnp.float32)
    acc = jnp.dot(code_ref[...], w, preferred_element_type=jnp.float32)
    acc = acc + b_ref[...]                      # (B, tn) + (1, tn) broadcast
    o_ref[...] = jnp.tanh(acc).astype(o_ref.dtype)


def _tpu_config():
    """Return (physical VMEM bytes per core, TensorCores sharing 'parallel')."""
    vmem_cap = 64 << 20          # conservative fallback (matches v7x per-TC)
    num_cores = 1
    try:
        info = pltpu.get_tpu_info()
        vmem_cap = int(getattr(info, "vmem_capacity_bytes", vmem_cap))
    except Exception:
        pass
    try:
        kind = jax.devices()[0].device_kind.lower()
        if ("7" in kind) or ("v4" in kind) or ("v5p" in kind):
            num_cores = 2        # dual-TC / megacore chips
        if "7" in kind:
            vmem_cap = min(vmem_cap, 64 << 20)   # v7x: 64 MiB per TC
    except Exception:
        pass
    return vmem_cap, num_cores


def _choose_tiling(N, L, batch_hint, weight_bytes, out_bytes, *,
                   num_cores, vmem_budget):
    """Return (tile_lanes, num_steps): column tile width in 128-lane units."""
    total_lanes = _cdiv(N, _LANE)
    weight_total = L * total_lanes * _LANE * weight_bytes

    # Double-buffered per-128-column bytes (weight + output + bias) and the
    # resident codes block (also double-buffered by the auto-pipeline).
    per_lane = 2 * _LANE * (L * weight_bytes + batch_hint * out_bytes + 4)
    fixed = 2 * batch_hint * L * 4

    # Small-weight fast path: stream the whole (padded) weight in one step.
    if weight_total <= (4 << 20) and fixed + total_lanes * per_lane <= vmem_budget:
        return total_lanes, 1

    # ~2 MiB of weight per step amortizes the ~0.35us per-step overhead; the
    # kernel is pure weight streaming, so bigger tiles buy nothing.
    tile_lanes = max(1, (2 << 20) // (L * _LANE * weight_bytes))

    # VMEM cap.
    if vmem_budget > fixed + per_lane:
        tile_lanes = min(tile_lanes, (vmem_budget - fixed) // per_lane)
    else:
        tile_lanes = 1

    # Dual-TC chips: keep >= 2 steps per core so both cores stream balanced,
    # pipelined column ranges.  Single-TC chips: no artificial minimum.
    if num_cores > 1:
        min_steps = 2 * num_cores
        if total_lanes >= min_steps:
            tile_lanes = min(tile_lanes, total_lanes // min_steps)
    tile_lanes = max(1, min(tile_lanes, total_lanes))

    # Prefer a tile count that divides the lane count (no column padding, free
    # wrapper slice) as long as it shrinks the tile by less than 2x.
    for cand in range(tile_lanes, max(1, tile_lanes // 2) - 1, -1):
        if total_lanes % cand == 0:
            tile_lanes = cand
            break

    return tile_lanes, _cdiv(total_lanes, tile_lanes)


@functools.partial(
    jax.jit,
    static_argnames=("channels", "height", "width", "n_valid", "tile_n",
                     "num_steps", "weight_bytes", "out_dtype", "vmem_cap"))
def _forward_impl(codes, weight_p, bias_p, *, channels, height, width, n_valid,
                  tile_n, num_steps, weight_bytes, out_dtype, vmem_cap):
    B, L = codes.shape
    B_pad = _round_up(B, _SUBLANE)
    N_pad = num_steps * tile_n
    out_bytes = jnp.dtype(out_dtype).itemsize

    # Only the (tiny) codes get padded per call; padded rows cost tanh(0)
    # writes that are sliced off below.
    codes_p = codes if B_pad == B else jnp.pad(codes, ((0, B_pad - B), (0, 0)))

    # Scoped-VMEM limit from the actual per-step footprint (v5e's 16 MiB
    # default would otherwise bind), clamped under the physical capacity.
    footprint = (2 * B_pad * L * 4
                 + 2 * tile_n * (L * weight_bytes + B_pad * out_bytes + 4))
    vmem_limit = int(min(max(int(footprint * 1.25), 16 << 20),
                         int(vmem_cap * 0.75)))

    cost = pl.CostEstimate(
        flops=2 * B_pad * L * N_pad,
        transcendentals=B_pad * N_pad,
        bytes_accessed=int(L * N_pad * weight_bytes + B_pad * N_pad * out_bytes
                           + B_pad * L * 4 + N_pad * 4),
    )

    flat = pl.pallas_call(
        _generator_kernel,
        out_shape=jax.ShapeDtypeStruct((B_pad, N_pad), out_dtype),
        grid_spec=pltpu.PrefetchScalarGridSpec(
            num_scalar_prefetch=0,
            grid=(num_steps,),
            in_specs=[
                # codes: full block, constant index -> resident, no re-DMA.
                pl.BlockSpec((B_pad, L), lambda j: (0, 0)),
                # weight: lane-dense column tile (dominant HBM stream).
                pl.BlockSpec((L, tile_n), lambda j: (0, j)),
                # bias: matching column tile.
                pl.BlockSpec((1, tile_n), lambda j: (0, j)),
            ],
            out_specs=pl.BlockSpec((B_pad, tile_n), lambda j: (0, j)),
        ),
        compiler_params=pltpu.CompilerParams(
            dimension_semantics=("parallel",),
            vmem_limit_bytes=vmem_limit,
        ),
        cost_estimate=cost,
    )(codes_p, weight_p, bias_p)

    # Identity output pipe; drop padding (free view when nothing was padded).
    if B_pad != B or N_pad != n_valid:
        flat = flat[:B, :n_valid]
    return flat.reshape(B, channels, height, width)


def make_linear_generator(weight, bias, *, channels, height, width,
                          use_bf16_weights=True, output_dtype=jnp.float32,
                          tile_n=None, batch_hint=32):
    """Build forward(codes) -> (B, C, H, W) stimuli for a linear tanh decoder.

    Weight padding + cast to the streamed dtype happens ONCE here, so each
    forward call only pays the kernel's own HBM traffic.
    """
    L, N = weight.shape
    assert bias.shape == (N,)
    assert N == channels * height * width

    w_dtype = jnp.bfloat16 if use_bf16_weights else jnp.float32
    weight_bytes = 2 if use_bf16_weights else 4
    out_bytes = jnp.dtype(output_dtype).itemsize

    vmem_cap, num_cores = _tpu_config()

    if tile_n is None:
        tile_lanes, num_steps = _choose_tiling(
            N, L, max(batch_hint, _SUBLANE), weight_bytes, out_bytes,
            num_cores=num_cores, vmem_budget=int(vmem_cap * 0.6))
        tile_n = tile_lanes * _LANE
    else:
        assert tile_n % _LANE == 0
        num_steps = _cdiv(_round_up(N, _LANE), tile_n)

    N_pad = num_steps * tile_n

    # One-time prep: zero-pad columns to the tile multiple (padded columns
    # produce tanh(0)=0 and are discarded) and cast the weight stream dtype.
    weight_p = jax.device_put(
        jnp.pad(weight.astype(jnp.float32), ((0, 0), (0, N_pad - N))).astype(w_dtype))
    bias_p = jax.device_put(
        jnp.pad(bias.astype(jnp.float32), (0, N_pad - N)).reshape(1, N_pad))

    def forward(codes):
        # Codes stay f32 (only the weight operand is quantized) so this forward
        # remains well-conditioned for gradient-based latent retrieval.
        return _forward_impl(
            codes.astype(jnp.float32), weight_p, bias_p,
            channels=channels, height=height, width=width, n_valid=N,
            tile_n=tile_n, num_steps=num_steps, weight_bytes=weight_bytes,
            out_dtype=output_dtype, vmem_cap=vmem_cap)

    return forward


def _reference(codes, weight, bias, channels, height, width):
    flat = jnp.tanh(codes @ weight + bias[None, :])
    return flat.reshape(codes.shape[0], channels, height, width)


if __name__ == "__main__":
    # Small, deterministic shapes: latent code (B, L) -> stimuli (B, C, H, W)
    B, L = 2, 32
    C, H, W = 3, 16, 16
    N = C * H * W  # 768

    key = jax.random.PRNGKey(0)
    k_code, k_w, k_b = jax.random.split(key, 3)

    codes = jax.random.normal(k_code, (B, L), dtype=jnp.float32)
    weight = jax.random.normal(k_w, (L, N), dtype=jnp.float32) * (1.0 / jnp.sqrt(L))
    bias = jax.random.normal(k_b, (N,), dtype=jnp.float32) * 0.01

    ref = _reference(codes, weight, bias, C, H, W)

    # Exact-precision path (f32 weight streaming) -- tight correctness check.
    fwd_f32 = make_linear_generator(weight, bias, channels=C, height=H, width=W,
                                    use_bf16_weights=False)
    out_f32 = jax.block_until_ready(fwd_f32(codes))
    assert out_f32.shape == (B, C, H, W)
    assert jnp.allclose(out_f32, ref, atol=1e-5, rtol=1e-5)

    # Default fast path: bf16 weight streaming (codes + accumulation stay f32).
    fwd = make_linear_generator(weight, bias, channels=C, height=H, width=W)
    out = jax.block_until_ready(fwd(codes))
    out = jax.block_until_ready(fwd(codes))   # 2nd call: no re-pad / re-cast
    assert out.shape == (B, C, H, W)
    assert jnp.allclose(out, ref, atol=3e-2, rtol=0.0)

    print("KERNEL_OK")
</pallas_src>

<mosaic_0001>
module attributes {stable_mosaic.version = 11 : i64} {
  func.func @_generator_kernel(%arg0: i32, %arg1: memref<8x32xf32, #tpu.memory_space<vmem>>, %arg2: memref<32x768xf32, #tpu.memory_space<vmem>>, %arg3: memref<1x768xf32, #tpu.memory_space<vmem>>, %arg4: memref<8x768xf32, #tpu.memory_space<vmem>>) attributes {dimension_semantics = [#tpu.dimension_semantics<parallel>], iteration_bounds = array<i64: 1>, scalar_prefetch = 0 : i64, scratch_operands = 0 : i64, tpu.core_type = #tpu.core_type<tc>, window_params = [{pipeline_mode = #tpu.pipeline_mode<synchronous>, transform_indices = @transform_0, window_bounds = array<i64: 8, 32>}, {transform_indices = @transform_1, window_bounds = array<i64: 32, 768>}, {transform_indices = @transform_2, window_bounds = array<i64: 1, 768>}, {transform_indices = @transform_3, window_bounds = array<i64: 8, 768>}]} {
    %c0 = arith.constant 0 : index
    %c0_0 = arith.constant 0 : index
    %0 = vector.load %arg2[%c0, %c0_0] : memref<32x768xf32, #tpu.memory_space<vmem>>, vector<32x768xf32>
    %c0_1 = arith.constant 0 : index
    %c0_2 = arith.constant 0 : index
    %1 = vector.load %arg1[%c0_1, %c0_2] : memref<8x32xf32, #tpu.memory_space<vmem>>, vector<8x32xf32>
    %cst = arith.constant dense<0.000000e+00> : vector<8x768xf32>
    %2 = tpu.matmul %1, %0, %cst {dimension_numbers = #tpu.dot_dimension_numbers<[1], [0], [0], [1], [0, 0, 1, 1], [], []>} : vector<8x32xf32>, vector<32x768xf32>, vector<8x768xf32> -> vector<8x768xf32>
    %c0_3 = arith.constant 0 : index
    %c0_4 = arith.constant 0 : index
    %3 = vector.load %arg3[%c0_3, %c0_4] : memref<1x768xf32, #tpu.memory_space<vmem>>, vector<1x768xf32>
    %4 = vector.broadcast %3 : vector<1x768xf32> to vector<8x768xf32>
    %5 = arith.addf %2, %4 : vector<8x768xf32>
    %6 = math.tanh %5 : vector<8x768xf32>
    %c0_5 = arith.constant 0 : index
    %c0_6 = arith.constant 0 : index
    %7 = vector.load %arg4[%c0_5, %c0_6] : memref<8x768xf32, #tpu.memory_space<vmem>>, vector<8x768xf32>
    tpu.vector_store %arg4[%c0_5, %c0_6], %6 {strides = array<i32>} : memref<8x768xf32, #tpu.memory_space<vmem>>, vector<8x768xf32>,
    return
  }
  func.func @transform_0(%arg0: i32) -> (i32, i32) {
    %c0_i32 = arith.constant 0 : i32
    %c0_i32_0 = arith.constant 0 : i32
    %c0_i32_1 = arith.constant 0 : i32
    return %c0_i32, %c0_i32_0 : i32, i32
  }
  func.func @transform_1(%arg0: i32) -> (i32, i32) {
    %c0_i32 = arith.constant 0 : i32
    %c0_i32_0 = arith.constant 0 : i32
    return %c0_i32, %arg0 : i32, i32
  }
  func.func @transform_2(%arg0: i32) -> (i32, i32) {
    %c0_i32 = arith.constant 0 : i32
    %c0_i32_0 = arith.constant 0 : i32
    return %c0_i32, %arg0 : i32, i32
  }
  func.func @transform_3(%arg0: i32) -> (i32, i32) {
    %c0_i32 = arith.constant 0 : i32
    %c0_i32_0 = arith.constant 0 : i32
    return %c0_i32, %arg0 : i32, i32
  }
}

</mosaic_0001>

<llo_original>
// kernel: _forward_impl.1
$region0: #{_forward_impl.1}
  #allocation0 [shape = 'u32[]', space=smem, size = 0x4, offset = 0x4, fixed_abs, tag = 'smem constant byte address 0x4 - core index']
  #allocation1 [shape = 'u32[72,128]{1,0:T(1,128)}', space=vmem, size = 0x9000, scoped, tag = 'internal scratch']
  %s0 = inlined_call_operand.vmem [shape: f32[8,32], index: 0, kind: input, shape index: {}]
  %s1 = inlined_call_operand.hbm [shape: f32[32,768], index: 1, kind: input, shape index: {}]
  %s2 = inlined_call_operand.vmem [shape: f32[1,768], index: 2, kind: input, shape index: {}]
  %s3 = inlined_call_operand.vmem [shape: f32[8,768], index: 3, kind: output, shape index: {}]
  %s4 = sld [smem:[#allocation0]]
  $region26: #{_forward_impl.1} parent=0
    _
  %s6 = ssub.s32 1, %s4
  %s7 = scalar_select 0, %s6, %s4
  $region1: #{_forward_impl.1} parent=0
    #allocation2 [shape = 'u8[98304]{0}', space=vmem, size = 0x18000, scoped, tag = 'input window, operand 1, single buffered']
    #allocation3 [shape = 's32[1]{0}', space=sflag, size = 0x4, scoped, tag = 'scoped memory for _forward_impl.1']
    %8 = vsyncpa [#allocation3], 0
    // Predicated region
    $region2: #{_forward_impl.1} parent=1 // pred_check
      _
    $region3: #{_forward_impl.1} parent=1 // pred_check_branch
      %10 = sbr.rel (0) target = $region5
    $region4: #{_forward_impl.1} parent=1 // pred_region
      _
    $region5: #{_forward_impl.1} parent=1 // pred_fallthru
      _
    // Predicated region
    $region6: #{_forward_impl.1} parent=1 // pred_check
      _
    $region7: #{_forward_impl.1} parent=1 // pred_check_branch
      %12 = sbr.rel (0) target = $region9
    $region8: #{_forward_impl.1} parent=1 // pred_region
      %14 = vsyncadd [#allocation3], 0
      %s15 = sshll.u32 %s1, 4
      %s16 = int_to_ptr.hbm [resolvable:$true] %s15
      %s17 = sshll.u32 [#allocation2], 4
      %s18 = int_to_ptr.vmem [resolvable:$true] %s17
      %23 = dma.hbm_to_vmem [thread:$0]  %s16, 3072, %s18, [#allocation3], 768, 768, 48
    $region9: #{_forward_impl.1} parent=1 // pred_fallthru
      _
    // Predicated region
    $region10: #{_forward_impl.1} parent=1 // pred_check
      _
    $region11: #{_forward_impl.1} parent=1 // pred_check_branch
      %25 = sbr.rel (0) target = $region13
    $region12: #{_forward_impl.1} parent=1 // pred_region
      _
    $region13: #{_forward_impl.1} parent=1 // pred_fallthru
      _
    // Predicated region
    $region14: #{_forward_impl.1} parent=1 // pred_check
      _
    $region15: #{_forward_impl.1} parent=1 // pred_check_branch
      %27 = sbr.rel (0) target = $region17
    $region16: #{_forward_impl.1} parent=1 // pred_region
      %29 = dma.done [#allocation3], 3072
    $region17: #{_forward_impl.1} parent=1 // pred_fallthru
      _
    %v30 = vld [vmem:[#allocation2] sm:$0xff]
    %v31 = vld [vmem:[#allocation2 + $0x8] sm:$0xff]
    %v32 = vld [vmem:[#allocation2 + $0x10] sm:$0xff]
    %v33 = vld [vmem:[#allocation2 + $0x18] sm:$0xff]
    %v34 = vld [vmem:[#allocation2 + $0x20] sm:$0xff]
    %v35 = vld [vmem:[#allocation2 + $0x28] sm:$0xff]
    %v36 = vld [vmem:[#allocation2 + $0x30] sm:$0xff]
    %v37 = vld [vmem:[#allocation2 + $0x38] sm:$0xff]
    %v38 = vld [vmem:[#allocation2 + $0x40] sm:$0xff]
    %v39 = vld [vmem:[#allocation2 + $0x48] sm:$0xff]
    %v40 = vld [vmem:[#allocation2 + $0x50] sm:$0xff]
    %v41 = vld [vmem:[#allocation2 + $0x58] sm:$0xff]
    %v42 = vld [vmem:[#allocation2 + $0x60] sm:$0xff]
    %v43 = vld [vmem:[#allocation2 + $0x68] sm:$0xff]
    %v44 = vld [vmem:[#allocation2 + $0x70] sm:$0xff]
    %v45 = vld [vmem:[#allocation2 + $0x78] sm:$0xff]
    %v46 = vld [vmem:[#allocation2 + $0x80] sm:$0xff]
    %v47 = vld [vmem:[#allocation2 + $0x88] sm:$0xff]
    %v48 = vld [vmem:[#allocation2 + $0x90] sm:$0xff]
    %v49 = vld [vmem:[#allocation2 + $0x98] sm:$0xff]
    %v50 = vld [vmem:[#allocation2 + $0xa0] sm:$0xff]
    %v51 = vld [vmem:[#allocation2 + $0xa8] sm:$0xff]
    %v52 = vld [vmem:[#allocation2 + $0xb0] sm:$0xff]
    %v53 = vld [vmem:[#allocation2 + $0xb8] sm:$0xff]
    %v54 = vld [vmem:[%s0] sm:$0xff]
    %v55 = vld [vmem:[%s2] sm:$0x3f]
    %v57 = vperm.slane %v55, 0
    %v58 = vperm.slane %v55, 1
    %v59 = vperm.slane %v55, 2
    %v60 = vperm.slane %v55, 3
    %v61 = vperm.slane %v55, 4
    %v62 = vperm.slane %v55, 5
    %vm69 = vcmask 261120
    %v71 = vsel %vm69, %v54, 0
    %73 = vmatpush.msra.mxu0 0.0
    %74 = vmatpush.msra.mxu0 0.0
    %75 = vmatpush.msra.mxu0 0.0
    %76 = vmatpush.msra.mxu0 0.0
    %77 = vmatpush.msra.mxu0 0.0
    %78 = vmatpush.msra.mxu0 0.0
    %79 = vmatpush.msra.mxu0 0.0
    %80 = vmatpush.msra.mxu0 0.0
    %81 = vmatpush.msra.mxu0 0.0
    %82 = vmatpush.msra.mxu0 0.0
    %83 = vmatpush.msra.mxu0 0.0
    %84 = vmatpush.msra.mxu0 0.0
    %85 = vmatpush.msra.mxu0 %v48
    %86 = vmatpush.msra.mxu0 %v42
    %87 = vmatpush.msra.mxu0 %v36
    %88 = vmatpush.msra.mxu0 %v30
    %89 = vmatmul.f32.gmra.mxu0 %v71
    %v90 = vpop.f32.mrf.mxu0
    %v91 = vadd.f32 %v57, %v90
    %92 = vdwg.mxu0
    %93 = vmatpush.msra.mxu0 0.0
    %94 = vmatpush.msra.mxu0 0.0
    %95 = vmatpush.msra.mxu0 0.0
    %96 = vmatpush.msra.mxu0 0.0
    %97 = vmatpush.msra.mxu0 0.0
    %98 = vmatpush.msra.mxu0 0.0
    %99 = vmatpush.msra.mxu0 0.0
    %100 = vmatpush.msra.mxu0 0.0
    %101 = vmatpush.msra.mxu0 0.0
    %102 = vmatpush.msra.mxu0 0.0
    %103 = vmatpush.msra.mxu0 0.0
    %104 = vmatpush.msra.mxu0 0.0
    %105 = vmatpush.msra.mxu0 %v49
    %106 = vmatpush.msra.mxu0 %v43
    %107 = vmatpush.msra.mxu0 %v37
    %108 = vmatpush.msra.mxu0 %v31
    %109 = vmatmul.f32.gmra.mxu0 %v71
    %v110 = vpop.f32.mrf.mxu0
    %v111 = vadd.f32 %v58, %v110
    %112 = vdwg.mxu0
    %113 = vmatpush.msra.mxu0 0.0
    %114 = vmatpush.msra.mxu0 0.0
    %115 = vmatpush.msra.mxu0 0.0
    %116 = vmatpush.msra.mxu0 0.0
    %117 = vmatpush.msra.mxu0 0.0
    %118 = vmatpush.msra.mxu0 0.0
    %119 = vmatpush.msra.mxu0 0.0
    %120 = vmatpush.msra.mxu0 0.0
    %121 = vmatpush.msra.mxu0 0.0
    %122 = vmatpush.msra.mxu0 0.0
    %123 = vmatpush.msra.mxu0 0.0
    %124 = vmatpush.msra.mxu0 0.0
    %125 = vmatpush.msra.mxu0 %v50
    %126 = vmatpush.msra.mxu0 %v44
    %127 = vmatpush.msra.mxu0 %v38
    %128 = vmatpush.msra.mxu0 %v32
    %129 = vmatmul.f32.gmra.mxu0 %v71
    %v130 = vpop.f32.mrf.mxu0
    %v131 = vadd.f32 %v59, %v130
    %132 = vdwg.mxu0
    %133 = vmatpush.msra.mxu0 0.0
    %134 = vmatpush.msra.mxu0 0.0
    %135 = vmatpush.msra.mxu0 0.0
    %136 = vmatpush.msra.mxu0 0.0
    %137 = vmatpush.msra.mxu0 0.0
    %138 = vmatpush.msra.mxu0 0.0
    %139 = vmatpush.msra.mxu0 0.0
    %140 = vmatpush.msra.mxu0 0.0
    %141 = vmatpush.msra.mxu0 0.0
    %142 = vmatpush.msra.mxu0 0.0
    %143 = vmatpush.msra.mxu0 0.0
    %144 = vmatpush.msra.mxu0 0.0
    %145 = vmatpush.msra.mxu0 %v51
    %146 = vmatpush.msra.mxu0 %v45
    %147 = vmatpush.msra.mxu0 %v39
    %148 = vmatpush.msra.mxu0 %v33
    %149 = vmatmul.f32.gmra.mxu0 %v71
    %v150 = vpop.f32.mrf.mxu0
    %v151 = vadd.f32 %v60, %v150
    %152 = vdwg.mxu0
    %153 = vmatpush.msra.mxu0 0.0
    %154 = vmatpush.msra.mxu0 0.0
    %155 = vmatpush.msra.mxu0 0.0
    %156 = vmatpush.msra.mxu0 0.0
    %157 = vmatpush.msra.mxu0 0.0
    %158 = vmatpush.msra.mxu0 0.0
    %159 = vmatpush.msra.mxu0 0.0
    %160 = vmatpush.msra.mxu0 0.0
    %161 = vmatpush.msra.mxu0 0.0
    %162 = vmatpush.msra.mxu0 0.0
    %163 = vmatpush.msra.mxu0 0.0
    %164 = vmatpush.msra.mxu0 0.0
    %165 = vmatpush.msra.mxu0 %v52
    %166 = vmatpush.msra.mxu0 %v46
    %167 = vmatpush.msra.mxu0 %v40
    %168 = vmatpush.msra.mxu0 %v34
    %169 = vmatmul.f32.gmra.mxu0 %v71
    %v170 = vpop.f32.mrf.mxu0
    %v171 = vadd.f32 %v61, %v170
    %172 = vdwg.mxu0
    %173 = vmatpush.msra.mxu0 0.0
    %174 = vmatpush.msra.mxu0 0.0
    %175 = vmatpush.msra.mxu0 0.0
    %176 = vmatpush.msra.mxu0 0.0
    %177 = vmatpush.msra.mxu0 0.0
    %178 = vmatpush.msra.mxu0 0.0
    %179 = vmatpush.msra.mxu0 0.0
    %180 = vmatpush.msra.mxu0 0.0
    %181 = vmatpush.msra.mxu0 0.0
    %182 = vmatpush.msra.mxu0 0.0
    %183 = vmatpush.msra.mxu0 0.0
    %184 = vmatpush.msra.mxu0 0.0
    %185 = vmatpush.msra.mxu0 %v53
    %186 = vmatpush.msra.mxu0 %v47
    %187 = vmatpush.msra.mxu0 %v41
    %188 = vmatpush.msra.mxu0 %v35
    %189 = vmatmul.f32.gmra.mxu0 %v71
    %v190 = vpop.f32.mrf.mxu0
    %v191 = vadd.f32 %v62, %v190
    %192 = vdwg.mxu0
    %v193 = vtanh.pop %v91
    %v194 = vtanh.pop %v111
    %v195 = vtanh.pop %v131
    %v196 = vtanh.pop %v151
    %v197 = vtanh.pop %v171
    %v198 = vtanh.pop %v191
    %199 = vst [vmem:[%s3] sm:$0xff] %v193
    %200 = vst [vmem:[%s3 + $0x8] sm:$0xff] %v194
    %201 = vst [vmem:[%s3 + $0x10] sm:$0xff] %v195
    %202 = vst [vmem:[%s3 + $0x18] sm:$0xff] %v196
    %203 = vst [vmem:[%s3 + $0x20] sm:$0xff] %v197
    %204 = vst [vmem:[%s3 + $0x28] sm:$0xff] %v198
    // Predicated region
    $region18: #{_forward_impl.1} parent=1 // pred_check
      _
    $region19: #{_forward_impl.1} parent=1 // pred_check_branch
      %206 = sbr.rel (0) target = $region21
    $region20: #{_forward_impl.1} parent=1 // pred_region
      _
    $region21: #{_forward_impl.1} parent=1 // pred_fallthru
      _
    // Predicated region
    $region22: #{_forward_impl.1} parent=1 // pred_check
      _
    $region23: #{_forward_impl.1} parent=1 // pred_check_branch
      %208 = sbr.rel (0) target = $region25
    $region24: #{_forward_impl.1} parent=1 // pred_region
      _
    $region25: #{_forward_impl.1} parent=1 // pred_fallthru
      _
    %209 = vsyncpa [#allocation3], 1

</llo_original>
